<compile_context>
chip_gen: v7x
topology: tpu7x:2x2x1
jax: 0.10.0
libtpu: 0.0.40
codegen_flags: <defaults>
</compile_context>

<pallas_src>
import jax
import jax.numpy as jnp
from jax.experimental import pallas as pl
from jax.experimental.pallas import tpu as pltpu

_LANE = 128
_TARGET_BLOCK_BYTES = 4 * 1024 * 1024    # ~4 MiB per block
_VMEM_LIMIT_BYTES = 32 * 1024 * 1024     # explicit scoped-VMEM limit


def _make_clamp_kernel(min_value: float, max_value: float):
    def kernel(x_ref, o_ref):
        x = x_ref[...]
        lo = jnp.asarray(min_value, dtype=x.dtype)   # stay in-dtype: no promotion,
        hi = jnp.asarray(max_value, dtype=x.dtype)   # packed bf16/int path on VPU
        o_ref[...] = jnp.minimum(jnp.maximum(x, lo), hi)

    return kernel


def _round_up(a: int, b: int) -> int:
    return ((a + b - 1) // b) * b


def _sublane_multiple(dtype) -> int:
    # f32/i32 -> 8, bf16/f16 -> 16, int8/fp8 -> 32 (packed sublane count).
    itemsize = jnp.dtype(dtype).itemsize
    return max(8, 32 // max(1, itemsize))


def _num_tensorcores() -> int:
    """Best-effort TensorCore-per-chip count (v5e/v6e = 1, v7x = 2)."""
    try:
        info = pltpu.get_tpu_info()
        for attr in ("num_cores", "core_count", "num_tensorcores",
                     "tensorcore_count", "cores_per_chip"):
            v = getattr(info, attr, None)
            if isinstance(v, int) and v > 0:
                return v
    except Exception:
        pass
    return 1


def _choose_width(n: int, sub: int) -> int | None:
    """Widest lane-dense (multiple of 128) last dim that divides n exactly."""
    for w in (2048, 1024, 512, 256, 128):
        if n % w == 0 and n // w >= sub:
            return w
    for w in (2048, 1024, 512, 256, 128):
        if n % w == 0:
            return w
    return None


def clamp_pallas(x, min_value: float, max_value: float):
    """Elementwise clamp(x, min_value, max_value) via a Pallas TPU kernel."""
    orig_shape = x.shape
    dtype = x.dtype
    n = int(x.size)
    if n == 0:
        return x

    itemsize = jnp.dtype(dtype).itemsize
    sub = _sublane_multiple(dtype)

    x_flat = jnp.ravel(x)
    width = _choose_width(n, sub)
    pad = 0
    if width is None:
        # Ragged size: pad by < 128 elements (small odd shapes only).
        # TODO(synk): handle the tail with a masked store instead of pad+slice
        # to drop the extra HBM pass on large non-divisible sizes.
        width = _LANE
        rows = pl.cdiv(n, width)
        pad = rows * width - n
        x_flat = jnp.pad(x_flat, (0, pad))
    rows = x_flat.size // width
    x2d = x_flat.reshape(rows, width)

    # --- Block sizing -------------------------------------------------------
    # Target ~4 MiB blocks, rows a multiple of the dtype's packed sublane count.
    max_block_rows = max(sub, ((_TARGET_BLOCK_BYTES // (width * itemsize)) // sub) * sub)
    ncores = _num_tensorcores()

    if rows <= max_block_rows:
        if ncores > 1 and rows > sub:
            # Multi-TC (v7x): split ~evenly across cores, sublane-rounded.
            block_rows = min(rows, _round_up(pl.cdiv(rows, ncores), sub))
        else:
            # Single-TC (v5e/v6e): one block — no extra grid-step overhead.
            block_rows = rows
    else:
        block_rows = max_block_rows
        if ncores > 1:
            nblocks = pl.cdiv(rows, block_rows)
            if nblocks <= 2 * ncores:
                # Few blocks: equalize them so no core is stuck with a tiny tail.
                target_blocks = _round_up(nblocks, ncores)
                block_rows = min(max_block_rows,
                                 _round_up(pl.cdiv(rows, target_blocks), sub))

    grid = (pl.cdiv(rows, block_rows),)

    out2d = pl.pallas_call(
        _make_clamp_kernel(float(min_value), float(max_value)),
        out_shape=jax.ShapeDtypeStruct((rows, width), dtype),
        grid=grid,
        in_specs=[pl.BlockSpec((block_rows, width), lambda i: (i, 0))],
        out_specs=pl.BlockSpec((block_rows, width), lambda i: (i, 0)),
        compiler_params=pltpu.CompilerParams(
            dimension_semantics=("parallel",),
            vmem_limit_bytes=_VMEM_LIMIT_BYTES,
        ),
        cost_estimate=pl.CostEstimate(
            flops=2 * n,                      # one max + one min per element
            transcendentals=0,
            bytes_accessed=2 * n * itemsize,  # read x + write out
        ),
    )(x2d)

    if pad:
        return out2d.reshape(-1)[:n].reshape(orig_shape)
    return out2d.reshape(orig_shape)


class ClampPallas:
    """Mirror of mlfab.nn.activations.Clamp (inplace is a no-op in JAX)."""

    def __init__(self, *, value=None, value_range=None, inplace: bool = False):
        assert (value is None) != (value_range is None), (
            "Exactly one of `value` or `value_range` must be specified."
        )
        if value is not None:
            value_range = (-value, value)
        self.min_value, self.max_value = value_range
        self.inplace = inplace  # functional semantics; result returned either way
        assert self.min_value < self.max_value

    def __call__(self, x):
        return clamp_pallas(x, self.min_value, self.max_value)


if __name__ == "__main__":
    key = jax.random.PRNGKey(0)
    # NCHW input, consistent with conv-style activation usage.
    x = jax.random.normal(key, (2, 4, 16, 16), dtype=jnp.float32) * 3.0

    mod = ClampPallas(value=1.0)  # clamps to [-1, 1]
    y = jax.block_until_ready(mod(x))
    ref = jnp.clip(x, -1.0, 1.0)
    assert y.shape == x.shape and y.dtype == x.dtype
    assert jnp.allclose(y, ref), "mismatch vs reference clamp (f32)"

    # value_range path + ragged size (pads < 128 elements).
    x2 = jax.random.normal(jax.random.PRNGKey(1), (3, 5, 7), dtype=jnp.float32) * 2.0
    mod2 = ClampPallas(value_range=(-0.5, 0.25))
    y2 = jax.block_until_ready(mod2(x2))
    assert jnp.allclose(y2, jnp.clip(x2, -0.5, 0.25)), "mismatch on ragged case"

    # bf16 path exercises the dtype-aware (16-row) sublane rounding.
    x3 = (jax.random.normal(jax.random.PRNGKey(2), (4, 8, 32)) * 3.0).astype(jnp.bfloat16)
    y3 = jax.block_until_ready(ClampPallas(value=2.0)(x3))
    assert y3.dtype == jnp.bfloat16
    assert jnp.allclose(
        y3.astype(jnp.float32), jnp.clip(x3.astype(jnp.float32), -2.0, 2.0)
    ), "mismatch on bf16 case"

    print("KERNEL_OK")
</pallas_src>

<mosaic_0001>
module attributes {stable_mosaic.version = 11 : i64} {
  func.func @kernel(%arg0: i32, %arg1: memref<8x256xf32, #tpu.memory_space<vmem>>, %arg2: memref<8x256xf32, #tpu.memory_space<vmem>>) attributes {dimension_semantics = [#tpu.dimension_semantics<parallel>], iteration_bounds = array<i64: 1>, scalar_prefetch = 0 : i64, scratch_operands = 0 : i64, tpu.core_type = #tpu.core_type<tc>, window_params = [{transform_indices = @transform_0, window_bounds = array<i64: 8, 256>}, {transform_indices = @transform_1, window_bounds = array<i64: 8, 256>}]} {
    %c0 = arith.constant 0 : index
    %c0_0 = arith.constant 0 : index
    %0 = vector.load %arg1[%c0, %c0_0] : memref<8x256xf32, #tpu.memory_space<vmem>>, vector<8x256xf32>
    %cst = arith.constant -1.000000e+00 : f32
    %1 = vector.broadcast %cst : f32 to vector<8x256xf32>
    %2 = arith.maximumf %0, %1 : vector<8x256xf32>
    %cst_1 = arith.constant 1.000000e+00 : f32
    %3 = vector.broadcast %cst_1 : f32 to vector<8x256xf32>
    %4 = arith.minimumf %2, %3 : vector<8x256xf32>
    %c0_2 = arith.constant 0 : index
    %c0_3 = arith.constant 0 : index
    %5 = vector.load %arg2[%c0_2, %c0_3] : memref<8x256xf32, #tpu.memory_space<vmem>>, vector<8x256xf32>
    tpu.vector_store %arg2[%c0_2, %c0_3], %4 {strides = array<i32>} : memref<8x256xf32, #tpu.memory_space<vmem>>, vector<8x256xf32>,
    return
  }
  func.func @transform_0(%arg0: i32) -> (i32, i32) {
    %c0_i32 = arith.constant 0 : i32
    %c0_i32_0 = arith.constant 0 : i32
    return %arg0, %c0_i32 : i32, i32
  }
  func.func @transform_1(%arg0: i32) -> (i32, i32) {
    %c0_i32 = arith.constant 0 : i32
    %c0_i32_0 = arith.constant 0 : i32
    return %arg0, %c0_i32 : i32, i32
  }
}

</mosaic_0001>

<llo_original>
// kernel: tpu_custom_call.1
$region0: #{tpu_custom_call.1}
  #allocation0 [shape = 'u32[]', space=smem, size = 0x4, offset = 0x4, fixed_abs, tag = 'smem constant byte address 0x4 - core index']
  #allocation1 [shape = 'u32[144,128]{1,0:T(1,128)}', space=vmem, size = 0x12000, scoped, tag = 'internal scratch']
  %s0 = inlined_call_operand.hbm [shape: f32[8,256], index: 0, kind: input, shape index: {}]
  %s1 = inlined_call_operand.hbm [shape: f32[8,256], index: 1, kind: output, shape index: {}]
  %s2 = sld [smem:[#allocation0]]
  $region18: #{tpu_custom_call.1} parent=0
    _
  %s4 = ssub.s32 1, %s2
  %s5 = scalar_select 0, %s4, %s2
  $region1: #{tpu_custom_call.1} parent=0
    #allocation2 [shape = 'u8[8192]{0}', space=vmem, size = 0x2000, scoped, tag = 'input window, operand 0, single buffered']
    #allocation3 [shape = 's32[1]{0}', space=sflag, size = 0x4, scoped, tag = 'scoped memory for tpu_custom_call.1']
    #allocation4 [shape = 's32[1]{0}', space=sflag, size = 0x4, scoped, tag = 'scoped memory for tpu_custom_call.1']
    #allocation5 [shape = 'u8[8192]{0}', space=vmem, size = 0x2000, scoped, tag = 'output window, operand 0, single buffered']
    %6 = vsyncpa [#allocation3], 0
    %7 = vsyncpa [#allocation4], 0
    // Predicated region
    $region2: #{tpu_custom_call.1} parent=1 // pred_check
      _
    $region3: #{tpu_custom_call.1} parent=1 // pred_check_branch
      %9 = sbr.rel (0) target = $region5
    $region4: #{tpu_custom_call.1} parent=1 // pred_region
      %s11 = ssub.s32 256, 256
      %12 = vsyncadd [#allocation3], %s11
      %s14 = sshll.u32 [#allocation2], 4
      %s15 = int_to_ptr.vmem [resolvable:$true] %s14
      %17 = dma.hbm_to_vmem [thread:$0]  %s0, 256, %s15, [#allocation3]
    $region5: #{tpu_custom_call.1} parent=1 // pred_fallthru
      _
    // Predicated region
    $region6: #{tpu_custom_call.1} parent=1 // pred_check
      _
    $region7: #{tpu_custom_call.1} parent=1 // pred_check_branch
      %19 = sbr.rel (0) target = $region9
    $region8: #{tpu_custom_call.1} parent=1 // pred_region
      %20 = dma.done [#allocation3], 256
    $region9: #{tpu_custom_call.1} parent=1 // pred_fallthru
      _
    %v21 = vld [vmem:[#allocation2] sm:$0xff]
    %v22 = vld [vmem:[#allocation2 + $0x8] sm:$0xff]
    %v23 = vmax.f32 %v21, -1.0
    %v24 = vmax.f32 %v22, -1.0
    %v25 = vmin.f32 %v23, 1.0
    %v26 = vmin.f32 %v24, 1.0
    %27 = vst [vmem:[#allocation5] sm:$0xff] %v25
    %28 = vst [vmem:[#allocation5 + $0x8] sm:$0xff] %v26
    // Predicated region
    $region10: #{tpu_custom_call.1} parent=1 // pred_check
      _
    $region11: #{tpu_custom_call.1} parent=1 // pred_check_branch
      %30 = sbr.rel (0) target = $region13
    $region12: #{tpu_custom_call.1} parent=1 // pred_region
      %s32 = ssub.s32 256, 256
      %33 = vsyncadd [#allocation4], %s32
      %s35 = sshll.u32 [#allocation5], 4
      %s36 = int_to_ptr.vmem [resolvable:$true] %s35
      %38 = dma.vmem_to_hbm [thread:$0]  %s36, 256, %s1, [#allocation4]
    $region13: #{tpu_custom_call.1} parent=1 // pred_fallthru
      _
    // Predicated region
    $region14: #{tpu_custom_call.1} parent=1 // pred_check
      _
    $region15: #{tpu_custom_call.1} parent=1 // pred_check_branch
      %40 = sbr.rel (0) target = $region17
    $region16: #{tpu_custom_call.1} parent=1 // pred_region
      %41 = dma.done [#allocation4], 256
    $region17: #{tpu_custom_call.1} parent=1 // pred_fallthru
      _
    %42 = vsyncpa [#allocation3], 1
    %43 = vsyncpa [#allocation4], 1

</llo_original>
